<compile_context>
chip_gen: v7x
topology: tpu7x:2x2x1
jax: 0.10.0
libtpu: 0.0.40
codegen_flags: <defaults>
</compile_context>

<pallas_src>
import functools
import math

import jax
import jax.numpy as jnp
from jax.experimental import pallas as pl
from jax.experimental.pallas import tpu as pltpu


def _round_up(v, m):
    return (v + m - 1) // m * m


def _cdiv(a, b):
    return (a + b - 1) // b


def _lorentz_epilogue(y, exp_scale, normalize, k):
    """y: (TM, N_pad) f32 pre-activation; returns the Lorentz output (f32)."""
    n_pad = y.shape[-1]
    # (1, N_pad) column mask; broadcasts for free in the selects below.
    col = jax.lax.broadcasted_iota(jnp.int32, (1, n_pad), 1)
    is_space = col >= 1                                 # col 0 = time
    space = jnp.where(is_space, y, 0.0)
    # Padded columns (>= out_features) are exactly zero (zero W columns), so
    # they contribute nothing to the squared norm.
    sq_norm = jnp.sum(space * space, axis=-1, keepdims=True)    # (TM, 1)

    if normalize:
        y_time = y[:, 0:1]                              # lane-0 slice
        s = jax.nn.sigmoid(y_time) * exp_scale          # exp(scale) precomputed
        mask = sq_norm <= 1e-10
        sq_safe = jnp.where(mask, 1.0, sq_norm)
        scale_fac = jnp.where(mask, 0.0, s * jax.lax.rsqrt(sq_safe))
        space_out = scale_fac * space
        time = jnp.where(mask, math.sqrt(k), jnp.sqrt(s * s + (k + 1e-5)))
    else:
        # manifold.add_time: time = sqrt(||space||^2 + k)
        time = jnp.sqrt(sq_norm + k)
        space_out = space
    return jnp.where(is_space, space_out, time)


def _lfc_resident_kernel(x_ref, w_ref, exp_scale_ref, o_ref, *, normalize, k):
    """Single-K-step kernel: the whole (padded) weight stays resident in VMEM."""
    a = x_ref[...]
    if a.dtype != w_ref.dtype:
        a = a.astype(w_ref.dtype)            # feed the MXU in the weight dtype
    y = jnp.dot(a, w_ref[...], preferred_element_type=jnp.float32)
    o_ref[...] = _lorentz_epilogue(
        y, exp_scale_ref[0], normalize, k).astype(o_ref.dtype)


def _lfc_ktiled_kernel(x_ref, w_ref, exp_scale_ref, o_ref, acc_ref, *,
                       normalize, k):
    """Fallback for weights too large to keep resident: contraction is tiled."""
    kk = pl.program_id(1)
    a = x_ref[...]
    if a.dtype != w_ref.dtype:
        a = a.astype(w_ref.dtype)
    part = jnp.dot(a, w_ref[...], preferred_element_type=jnp.float32)

    @pl.when(kk == 0)
    def _():
        acc_ref[...] = part                  # direct store: no zero + add

    @pl.when(kk > 0)
    def _():
        acc_ref[...] += part

    @pl.when(kk == pl.num_programs(1) - 1)
    def _():
        o_ref[...] = _lorentz_epilogue(
            acc_ref[...], exp_scale_ref[0], normalize, k).astype(o_ref.dtype)


def _vmem_capacity_bytes():
    try:
        info = pltpu.get_tpu_info()
        cap = int(getattr(info, "vmem_capacity_bytes", 0) or 0)
        if cap > 0:
            return cap
    except Exception:
        pass
    return 64 * 1024 * 1024      # conservative fallback (v7x-sized VMEM)


def lorentz_fully_connected(x, weight, scale, *, normalize=False, k=1.0,
                            mxu_dtype=jnp.bfloat16, tm=None, tk=512,
                            prefer_resident=True):
    """weight: (in_features, out_features) = PyTorch nn.Linear weight transposed.
    scale: shape-(1,) f32 array holding the module's `scale` parameter."""
    in_features, out_features = weight.shape
    assert x.shape[-1] == in_features
    lead_shape = x.shape[:-1]
    xb = x.reshape(-1, in_features)
    b = xb.shape[0]

    if mxu_dtype is None:
        mxu_dtype = weight.dtype
    mxu_dtype = jnp.dtype(mxu_dtype)
    x_item = jnp.dtype(x.dtype).itemsize
    w_item = mxu_dtype.itemsize
    o_item = jnp.dtype(x.dtype).itemsize

    # Generation-aware VMEM budgets (128 MiB on v5e/v6e, 64 MiB on v7x).
    vmem_cap = _vmem_capacity_bytes()
    budget = int(vmem_cap * 0.6)            # tile-size clamp
    vmem_limit = int(vmem_cap * 0.8)        # scoped limit handed to Mosaic

    # Lane-dense padding of feature axes.
    n_pad = _round_up(out_features, 128)
    kin128 = _round_up(in_features, 128)

    # Row tile: 512 on big-VMEM chips, 256 on 64 MiB chips; clamp for tiny b.
    if tm is None:
        tm = 512 if budget >= 60 * 1024 * 1024 else 256
    tm_actual = _round_up(min(tm, _round_up(b, 8)), 8)
    # Give 2-TC chips (v7x) at least 2 steps on the "parallel" axis.
    if _cdiv(b, tm_actual) == 1 and b >= 256:
        tm_actual = _round_up(_cdiv(b, 2), 8)

    def vmem_est(tm_, tk_, k_steps_):
        est = (2 * tm_ * tk_ * x_item        # double-buffered activation tile
               + 2 * tk_ * n_pad * w_item    # weight tile
               + 2 * tm_ * n_pad * o_item)   # output tile
        if k_steps_ > 1:
            est += tm_ * n_pad * 4           # f32 accumulator scratch
        return est

    # Resident-weight fast path: weight DMA'd from HBM exactly once.
    resident = prefer_resident and vmem_est(tm_actual, kin128, 1) <= budget

    if resident:
        tk_actual = kin128
        kin_pad = kin128
        k_steps = 1
    else:
        # Keep tk large and pad K up to a multiple of it (zero W rows are free)
        # instead of shrinking tk until it divides K.
        tk_actual = min(_round_up(tk, 128), kin128)
        kin_pad = _round_up(in_features, tk_actual)
        k_steps = kin_pad // tk_actual
        while vmem_est(tm_actual, tk_actual, k_steps) > budget and tk_actual > 128:
            tk_actual = max(128, tk_actual // 2)
            kin_pad = _round_up(in_features, tk_actual)
            k_steps = kin_pad // tk_actual
        while vmem_est(tm_actual, tk_actual, k_steps) > budget and tm_actual > 8:
            tm_actual = max(8, _round_up(tm_actual // 2, 8))
        # TODO(synk): for very large out_features an N grid axis (with a
        # two-pass Lorentz epilogue: global sq_norm before per-tile scaling)
        # would keep tm large instead of letting this clamp shrink it.

    b_pad = _round_up(b, tm_actual)

    # Weight: pad once (zero rows/cols), cast once to the MXU feed dtype.
    if (kin_pad, n_pad) != (in_features, out_features):
        w_p = jnp.pad(weight, ((0, kin_pad - in_features),
                               (0, n_pad - out_features)))
    else:
        w_p = weight
    w_p = w_p.astype(mxu_dtype)

    # Activations: only rewrite them in HBM when padding is actually required;
    # otherwise stream them untouched and cast per-tile inside the kernel.
    if (b_pad, kin_pad) != (b, in_features):
        xb_p = jnp.pad(xb, ((0, b_pad - b),
                            (0, kin_pad - in_features))).astype(mxu_dtype)
    else:
        xb_p = xb

    exp_scale = jnp.exp(jnp.asarray(scale, dtype=jnp.float32)).reshape((1,))

    rows = b_pad // tm_actual
    out_shape = jax.ShapeDtypeStruct((b_pad, n_pad), x.dtype)
    smem_spec = pl.BlockSpec(memory_space=pltpu.SMEM)

    if resident:
        out = pl.pallas_call(
            functools.partial(_lfc_resident_kernel,
                              normalize=normalize, k=float(k)),
            out_shape=out_shape,
            grid_spec=pltpu.PrefetchScalarGridSpec(
                num_scalar_prefetch=0,
                grid=(rows,),
                in_specs=[
                    pl.BlockSpec((tm_actual, kin_pad), lambda i: (i, 0)),
                    # Constant block index -> W fetched once, stays resident.
                    pl.BlockSpec((kin_pad, n_pad), lambda i: (0, 0)),
                    smem_spec,
                ],
                out_specs=pl.BlockSpec((tm_actual, n_pad), lambda i: (i, 0)),
            ),
            compiler_params=pltpu.CompilerParams(
                dimension_semantics=("parallel",),
                vmem_limit_bytes=vmem_limit,
            ),
        )(xb_p, w_p, exp_scale)
    else:
        out = pl.pallas_call(
            functools.partial(_lfc_ktiled_kernel,
                              normalize=normalize, k=float(k)),
            out_shape=out_shape,
            grid_spec=pltpu.PrefetchScalarGridSpec(
                num_scalar_prefetch=0,
                grid=(rows, k_steps),
                in_specs=[
                    pl.BlockSpec((tm_actual, tk_actual), lambda i, kk: (i, kk)),
                    pl.BlockSpec((tk_actual, n_pad), lambda i, kk: (kk, 0)),
                    smem_spec,
                ],
                out_specs=pl.BlockSpec((tm_actual, n_pad), lambda i, kk: (i, 0)),
                scratch_shapes=[pltpu.VMEM((tm_actual, n_pad), jnp.float32)],
            ),
            compiler_params=pltpu.CompilerParams(
                dimension_semantics=("parallel", "arbitrary"),
                vmem_limit_bytes=vmem_limit,
            ),
        )(xb_p, w_p, exp_scale)

    return out[:b, :out_features].reshape(*lead_shape, out_features)


def _reference(x, weight, scale, *, normalize=False, k=1.0, operand_dtype=None):
    """Plain-JAX reproduction of the PyTorch forward, for verification.
    operand_dtype lets the reference match a reduced-precision MXU feed."""
    xq = x if operand_dtype is None else x.astype(operand_dtype)
    wq = weight if operand_dtype is None else weight.astype(operand_dtype)
    y = jnp.einsum("...i,io->...o", xq, wq, preferred_element_type=jnp.float32)
    x_space = y[..., 1:]
    if normalize:
        s = jax.nn.sigmoid(y[..., 0:1]) * jnp.exp(jnp.asarray(scale, jnp.float32))
        sq = jnp.sum(x_space * x_space, axis=-1, keepdims=True)
        mask = sq <= 1e-10
        sq_safe = jnp.where(mask, 1.0, sq)
        unit = x_space / jnp.sqrt(sq_safe)
        x_space2 = s * unit
        x_time = jnp.sqrt(s * s + k + 1e-5)
        x_time = jnp.where(mask, jnp.sqrt(jnp.float32(k)), x_time)
        x_space2 = x_space2 * jnp.logical_not(mask).astype(x_space2.dtype)
        out = jnp.concatenate([x_time, x_space2], axis=-1)
    else:
        x_time = jnp.sqrt(jnp.sum(x_space * x_space, axis=-1, keepdims=True) + k)
        out = jnp.concatenate([x_time, x_space], axis=-1)
    return out.astype(x.dtype)


if __name__ == "__main__":
    key = jax.random.PRNGKey(0)
    init_std = 0.02
    manifold_k = 1.0                        # CustomLorentz curvature parameter
    scale = jnp.ones((1,), dtype=jnp.float32) * 2.3    # default init_scale

    # (in_features, out_features, batch, seq, extra kwargs)
    configs = [
        # resident-weight fast path, feature padding exercised
        (32, 32, 2, 8, dict()),
        # K-tiled fallback path: K padded 300 -> 384, 3 contraction steps
        (300, 96, 2, 8, dict(prefer_resident=False, tk=128)),
        # 128-aligned features: activation streamed unpadded, cast in-kernel
        (128, 128, 2, 8, dict()),
    ]

    for cfg_idx, (in_f, out_f, batch, seq, kwargs) in enumerate(configs):
        kx, kw_key = jax.random.split(jax.random.fold_in(key, cfg_idx))
        # Deterministic parameter init mirroring reset_parameters():
        # nn.Linear weight ~ U(-init_std, init_std), bias=False.
        weight = jax.random.uniform(kw_key, (in_f, out_f), dtype=jnp.float32,
                                    minval=-init_std, maxval=init_std)
        x = jax.random.normal(kx, (batch, seq, in_f), dtype=jnp.float32)

        for normalize in (False, True):
            # Default bf16 MXU feed vs a reference whose matmul operands are
            # also bf16 (accumulation is f32 in both).
            out = lorentz_fully_connected(
                x, weight, scale, normalize=normalize, k=manifold_k, **kwargs)
            out = jax.block_until_ready(out)
            ref = _reference(x, weight, scale, normalize=normalize,
                             k=manifold_k, operand_dtype=jnp.bfloat16)
            assert out.shape == (batch, seq, out_f)
            assert jnp.allclose(out, ref, atol=1e-4, rtol=1e-4), (
                f"bf16 mismatch (cfg={cfg_idx}, normalize={normalize})")

            # Exact f32 MXU feed vs plain f32 reference (tight tolerance).
            out32 = lorentz_fully_connected(
                x, weight, scale, normalize=normalize, k=manifold_k,
                mxu_dtype=jnp.float32, **kwargs)
            out32 = jax.block_until_ready(out32)
            ref32 = _reference(x, weight, scale, normalize=normalize,
                               k=manifold_k)
            assert jnp.allclose(out32, ref32, atol=1e-5, rtol=1e-5), (
                f"f32 mismatch (cfg={cfg_idx}, normalize={normalize})")

    print("KERNEL_OK")
</pallas_src>

<mosaic_0001>
module attributes {stable_mosaic.version = 11 : i64} {
  func.func @_lfc_resident_kernel(%arg0: i32, %arg1: memref<16x128xbf16, #tpu.memory_space<vmem>>, %arg2: memref<128x128xbf16, #tpu.memory_space<vmem>>, %arg3: memref<1xf32, #tpu.memory_space<smem>>, %arg4: memref<16x128xf32, #tpu.memory_space<vmem>>) attributes {dimension_semantics = [#tpu.dimension_semantics<parallel>], iteration_bounds = array<i64: 1>, scalar_prefetch = 0 : i64, scratch_operands = 0 : i64, tpu.core_type = #tpu.core_type<tc>, window_params = [{transform_indices = @transform_0, window_bounds = array<i64: 16, 128>}, {pipeline_mode = #tpu.pipeline_mode<synchronous>, transform_indices = @transform_1, window_bounds = array<i64: 128, 128>}, {transform_indices = @transform_2, window_bounds = array<i64: 1>}, {transform_indices = @transform_3, window_bounds = array<i64: 16, 128>}]} {
    %c0 = arith.constant 0 : index
    %c0_0 = arith.constant 0 : index
    %0 = vector.load %arg1[%c0, %c0_0] : memref<16x128xbf16, #tpu.memory_space<vmem>>, vector<16x128xbf16>
    %c0_1 = arith.constant 0 : index
    %c0_2 = arith.constant 0 : index
    %1 = vector.load %arg2[%c0_1, %c0_2] : memref<128x128xbf16, #tpu.memory_space<vmem>>, vector<128x128xbf16>
    %cst = arith.constant dense<0.000000e+00> : vector<16x128xf32>
    %2 = tpu.matmul %0, %1, %cst {dimension_numbers = #tpu.dot_dimension_numbers<[1], [0], [0], [1], [0, 0, 1, 1], [], []>} : vector<16x128xbf16>, vector<128x128xbf16>, vector<16x128xf32> -> vector<16x128xf32>
    %3 = tpu.iota {dimensions = array<i32: 1>} : vector<1x128xi32>
    %c1_i32 = arith.constant 1 : i32
    %4 = vector.broadcast %c1_i32 : i32 to vector<1x128xi32>
    %5 = arith.cmpi sge, %3, %4 : vector<1x128xi32>
    %cst_3 = arith.constant 0.000000e+00 : f32
    %6 = vector.shape_cast %5 : vector<1x128xi1> to vector<1x128xi1>
    %7 = vector.broadcast %6 : vector<1x128xi1> to vector<16x128xi1>
    %8 = vector.broadcast %cst_3 : f32 to vector<16x128xf32>
    %9 = arith.select %7, %2, %8 : vector<16x128xi1>, vector<16x128xf32>
    %10 = arith.mulf %9, %9 : vector<16x128xf32>
    %cst_4 = arith.constant dense<0.000000e+00> : vector<16xf32>
    %11 = vector.multi_reduction <add>, %10, %cst_4 [1] : vector<16x128xf32> to vector<16xf32>
    %12 = vector.shape_cast %11 : vector<16xf32> to vector<16x1xf32>
    %cst_5 = arith.constant 1.000000e+00 : f32
    %13 = vector.broadcast %cst_5 : f32 to vector<16x1xf32>
    %14 = arith.addf %12, %13 : vector<16x1xf32>
    %15 = math.sqrt %14 : vector<16x1xf32>
    %16 = vector.shape_cast %5 : vector<1x128xi1> to vector<1x128xi1>
    %17 = vector.broadcast %16 : vector<1x128xi1> to vector<16x128xi1>
    %18 = vector.shape_cast %15 : vector<16x1xf32> to vector<16x1xf32>
    %19 = vector.broadcast %18 : vector<16x1xf32> to vector<16x128xf32>
    %20 = arith.select %17, %9, %19 : vector<16x128xi1>, vector<16x128xf32>
    %c0_6 = arith.constant 0 : index
    %c0_7 = arith.constant 0 : index
    %21 = vector.load %arg4[%c0_6, %c0_7] : memref<16x128xf32, #tpu.memory_space<vmem>>, vector<16x128xf32>
    tpu.vector_store %arg4[%c0_6, %c0_7], %20 {strides = array<i32>} : memref<16x128xf32, #tpu.memory_space<vmem>>, vector<16x128xf32>,
    return
  }
  func.func @transform_0(%arg0: i32) -> (i32, i32) {
    %c0_i32 = arith.constant 0 : i32
    %c0_i32_0 = arith.constant 0 : i32
    return %arg0, %c0_i32 : i32, i32
  }
  func.func @transform_1(%arg0: i32) -> (i32, i32) {
    %c0_i32 = arith.constant 0 : i32
    %c0_i32_0 = arith.constant 0 : i32
    %c0_i32_1 = arith.constant 0 : i32
    return %c0_i32, %c0_i32_0 : i32, i32
  }
  func.func @transform_2(%arg0: i32) -> i32 {
    %c0_i32 = arith.constant 0 : i32
    %c0_i32_0 = arith.constant 0 : i32
    return %c0_i32 : i32
  }
  func.func @transform_3(%arg0: i32) -> (i32, i32) {
    %c0_i32 = arith.constant 0 : i32
    %c0_i32_0 = arith.constant 0 : i32
    return %arg0, %c0_i32 : i32, i32
  }
}

</mosaic_0001>

<llo_original>
// kernel: tpu_custom_call.1
$region0: #{tpu_custom_call.1}
  #allocation0 [shape = 'u32[]', space=smem, size = 0x4, offset = 0x4, fixed_abs, tag = 'smem constant byte address 0x4 - core index']
  #allocation1 [shape = 'u32[144,128]{1,0:T(1,128)}', space=vmem, size = 0x12000, scoped, tag = 'internal scratch']
  #allocation2 [shape = 'f32[1]{0:T(128)S(6)}', space=smem, size = 0x200, scoped, tag = 'scoped memory for tpu_custom_call.1']
  %s0 = inlined_call_operand.hbm [shape: bf16[16,128], index: 0, kind: input, shape index: {}]
  %s1 = inlined_call_operand.hbm [shape: bf16[128,128], index: 1, kind: input, shape index: {}]
  %s2 = inlined_call_operand.<no memory space> [shape: f32[1], index: 2, kind: input, shape index: {}]
  %s3 = inlined_call_operand.hbm [shape: f32[16,128], index: 3, kind: output, shape index: {}]
  %s4 = sld [smem:[#allocation0]]
  $region30: #{tpu_custom_call.1} parent=0
    _
  %s6 = ssub.s32 1, %s4
  %s7 = scalar_select 0, %s6, %s4
  %8 = sst [smem:[#allocation2]] %s2
  $region1: #{tpu_custom_call.1} parent=0
    #allocation3 [shape = 'u8[4096]{0}', space=vmem, size = 0x1000, scoped, tag = 'input window, operand 0, single buffered']
    #allocation4 [shape = 's32[1]{0}', space=sflag, size = 0x4, scoped, tag = 'scoped memory for tpu_custom_call.1']
    #allocation5 [shape = 's32[1]{0}', space=sflag, size = 0x4, scoped, tag = 'scoped memory for tpu_custom_call.1']
    #allocation6 [shape = 'u8[32768]{0}', space=vmem, size = 0x8000, scoped, tag = 'input window, operand 1, single buffered']
    #allocation7 [shape = 's32[1]{0}', space=sflag, size = 0x4, scoped, tag = 'scoped memory for tpu_custom_call.1']
    #allocation8 [shape = 'u8[8192]{0}', space=vmem, size = 0x2000, scoped, tag = 'output window, operand 0, single buffered']
    %9 = vsyncpa [#allocation4], 0
    %10 = vsyncpa [#allocation7], 0
    %11 = vsyncpa [#allocation5], 0
    // Predicated region
    $region2: #{tpu_custom_call.1} parent=1 // pred_check
      _
    $region3: #{tpu_custom_call.1} parent=1 // pred_check_branch
      %13 = sbr.rel (0) target = $region5
    $region4: #{tpu_custom_call.1} parent=1 // pred_region
      %s15 = ssub.s32 128, 128
      %16 = vsyncadd [#allocation4], %s15
      %s17 = sshll.u32 [#allocation3], 4
      %s18 = int_to_ptr.vmem [resolvable:$true] %s17
      %23 = dma.hbm_to_vmem [thread:$0]  %s0, 128, %s18, [#allocation4], 64, 64, 4
    $region5: #{tpu_custom_call.1} parent=1 // pred_fallthru
      _
    // Predicated region
    $region6: #{tpu_custom_call.1} parent=1 // pred_check
      _
    $region7: #{tpu_custom_call.1} parent=1 // pred_check_branch
      %25 = sbr.rel (0) target = $region9
    $region8: #{tpu_custom_call.1} parent=1 // pred_region
      %s27 = ssub.s32 1024, 1024
      %28 = vsyncadd [#allocation7], %s27
      %s29 = sshll.u32 [#allocation6], 4
      %s30 = int_to_ptr.vmem [resolvable:$true] %s29
      %35 = dma.hbm_to_vmem [thread:$0]  %s1, 1024, %s30, [#allocation7], 64, 64, 4
    $region9: #{tpu_custom_call.1} parent=1 // pred_fallthru
      _
    // Predicated region
    $region10: #{tpu_custom_call.1} parent=1 // pred_check
      _
    $region11: #{tpu_custom_call.1} parent=1 // pred_check_branch
      %37 = sbr.rel (0) target = $region13
    $region12: #{tpu_custom_call.1} parent=1 // pred_region
      _
    $region13: #{tpu_custom_call.1} parent=1 // pred_fallthru
      _
    // Predicated region
    $region14: #{tpu_custom_call.1} parent=1 // pred_check
      _
    $region15: #{tpu_custom_call.1} parent=1 // pred_check_branch
      %39 = sbr.rel (0) target = $region17
    $region16: #{tpu_custom_call.1} parent=1 // pred_region
      %40 = dma.done [#allocation4], 128
    $region17: #{tpu_custom_call.1} parent=1 // pred_fallthru
      _
    // Predicated region
    $region18: #{tpu_custom_call.1} parent=1 // pred_check
      _
    $region19: #{tpu_custom_call.1} parent=1 // pred_check_branch
      %42 = sbr.rel (0) target = $region21
    $region20: #{tpu_custom_call.1} parent=1 // pred_region
      %43 = dma.done [#allocation7], 1024
    $region21: #{tpu_custom_call.1} parent=1 // pred_fallthru
      _
    %v45 = vld [vmem:[#allocation3] sm:$0xf]
    %v46 = vld [vmem:[#allocation3 + $0x4] sm:$0xf]
    %v47 = vld [vmem:[#allocation6] sm:$0xf]
    %v48 = vld [vmem:[#allocation6 + $0x4] sm:$0xf]
    %v49 = vld [vmem:[#allocation6 + $0x8] sm:$0xf]
    %v50 = vld [vmem:[#allocation6 + $0xc] sm:$0xf]
    %v51 = vld [vmem:[#allocation6 + $0x10] sm:$0xf]
    %v52 = vld [vmem:[#allocation6 + $0x14] sm:$0xf]
    %v53 = vld [vmem:[#allocation6 + $0x18] sm:$0xf]
    %v54 = vld [vmem:[#allocation6 + $0x1c] sm:$0xf]
    %v55 = vld [vmem:[#allocation6 + $0x20] sm:$0xf]
    %v56 = vld [vmem:[#allocation6 + $0x24] sm:$0xf]
    %v57 = vld [vmem:[#allocation6 + $0x28] sm:$0xf]
    %v58 = vld [vmem:[#allocation6 + $0x2c] sm:$0xf]
    %v59 = vld [vmem:[#allocation6 + $0x30] sm:$0xf]
    %v60 = vld [vmem:[#allocation6 + $0x34] sm:$0xf]
    %v61 = vld [vmem:[#allocation6 + $0x38] sm:$0xf]
    %v62 = vld [vmem:[#allocation6 + $0x3c] sm:$0xf]
    %v65 = vunpack.c.l.b16 %v45
    %v66 = vunpack.c.l.b16 %v46
    %v67 = vpack.c.b16 %v66, %v65
    %v85 = vunpack.c.l.b16 %v47
    %v86 = vunpack.c.l.b16 %v48
    %v87 = vunpack.c.l.b16 %v49
    %v88 = vunpack.c.l.b16 %v50
    %v89 = vunpack.c.l.b16 %v51
    %v90 = vunpack.c.l.b16 %v52
    %v91 = vunpack.c.l.b16 %v53
    %v92 = vunpack.c.l.b16 %v54
    %v93 = vunpack.c.l.b16 %v55
    %v94 = vunpack.c.l.b16 %v56
    %v95 = vunpack.c.l.b16 %v57
    %v96 = vunpack.c.l.b16 %v58
    %v97 = vunpack.c.l.b16 %v59
    %v98 = vunpack.c.l.b16 %v60
    %v99 = vunpack.c.l.b16 %v61
    %v100 = vunpack.c.l.b16 %v62
    %v101 = vpack.c.b16 %v86, %v85
    %v102 = vpack.c.b16 %v88, %v87
    %v103 = vpack.c.b16 %v90, %v89
    %v104 = vpack.c.b16 %v92, %v91
    %v105 = vpack.c.b16 %v94, %v93
    %v106 = vpack.c.b16 %v96, %v95
    %v107 = vpack.c.b16 %v98, %v97
    %v108 = vpack.c.b16 %v100, %v99
    %117 = vmatprep.subr.bf16.mxu0 0
    %118 = vmatpush1.bf16.msra.mxu0 %v101
    %119 = vmatprep.subr.bf16.mxu0 0
    %120 = vmatpush1.bf16.msra.mxu0 %v102
    %121 = vmatprep.subr.bf16.mxu0 0
    %122 = vmatpush1.bf16.msra.mxu0 %v103
    %123 = vmatprep.subr.bf16.mxu0 0
    %124 = vmatpush1.bf16.msra.mxu0 %v104
    %125 = vmatprep.subr.bf16.mxu0 0
    %126 = vmatpush1.bf16.msra.mxu0 %v105
    %127 = vmatprep.subr.bf16.mxu0 0
    %128 = vmatpush1.bf16.msra.mxu0 %v106
    %129 = vmatprep.subr.bf16.mxu0 0
    %130 = vmatpush1.bf16.msra.mxu0 %v107
    %131 = vmatprep.subr.bf16.mxu0 0
    %132 = vmatpush1.bf16.msra.mxu0 %v108
    %133 = vmatprep.subr.bf16.mxu0 0
    %134 = vmatpush1.bf16.msra.mxu0 0
    %135 = vmatprep.subr.bf16.mxu0 0
    %136 = vmatpush1.bf16.msra.mxu0 0
    %137 = vmatprep.subr.bf16.mxu0 0
    %138 = vmatpush1.bf16.msra.mxu0 0
    %139 = vmatprep.subr.bf16.mxu0 0
    %140 = vmatpush1.bf16.msra.mxu0 0
    %141 = vmatprep.subr.bf16.mxu0 0
    %142 = vmatpush1.bf16.msra.mxu0 0
    %143 = vmatprep.subr.bf16.mxu0 0
    %144 = vmatpush1.bf16.msra.mxu0 0
    %145 = vmatprep.subr.bf16.mxu0 0
    %146 = vmatpush1.bf16.msra.mxu0 0
    %147 = vmatprep.subr.bf16.mxu0 0
    %148 = vmatpush1.bf16.msra.mxu0 0
    %149 = vmatprep.mubr.bf16.mxu0 0
    %150 = vmatmul.mubr.bf16.gmra.mrb[0].mxu0 %v67
    %v151 = vpop.f32.mrb[0].mxu0
    %v152 = vadd.f32 0.0, %v151
    %v153 = vpop.f32.mrb[0].mxu0
    %v154 = vpop.f32.mrb[0].mxu0
    %v155 = vadd.f32 0.0, %v154
    %v156 = vpop.f32.mrb[0].mxu0
    %157 = vdwg.mxu0
    %v158 = vlaneseq
    %v159 = vand.u32 %v158, 127
    %vm160 = vcmp.ge.s32.totalorder %v159, 1
    %v161 = vsel %vm160, 1, 0
    %vm162 = vcmp.eq.s32.totalorder %v161, 1
    %v163 = vsel %vm162, %v152, 0.0
    %v164 = vsel %vm162, %v155, 0.0
    %v165 = vmul.f32 %v163, %v163
    %v166 = vmul.f32 %v164, %v164
    %167 = vadd.xlane.f32.xlu0 %v165
    %v168 = vpop.xlane.xlu0 %167
    %169 = vadd.xlane.f32.xlu0 %v166
    %v170 = vpop.xlane.xlu0 %169
    %v171 = vadd.f32 %v168, 1.0
    %v172 = vadd.f32 %v170, 1.0
    %v173 = vrsqrt.pop %v171
    %v174 = vmul.f32 %v171, %v173
    %vm175 = vcmp.eq.f32.partialorder %v171, inf
    %v176 = vsel %vm175, %v171, %v174
    %vm177 = vcmp.eq.f32.partialorder %v171, 0.0
    %v178 = vand.u32 %v171, 2147483648
    %v179 = vsel %vm177, %v178, %v176
    %v180 = vrsqrt.pop %v172
    %v181 = vmul.f32 %v172, %v180
    %vm182 = vcmp.eq.f32.partialorder %v172, inf
    %v183 = vsel %vm182, %v172, %v181
    %vm184 = vcmp.eq.f32.partialorder %v172, 0.0
    %v185 = vand.u32 %v172, 2147483648
    %v186 = vsel %vm184, %v185, %v183
    %v187 = vsel %vm162, %v152, %v179
    %v188 = vsel %vm162, %v155, %v186
    %189 = vst [vmem:[#allocation8] sm:$0xff] %v187
    %190 = vst [vmem:[#allocation8 + $0x8] sm:$0xff] %v188
    // Predicated region
    $region22: #{tpu_custom_call.1} parent=1 // pred_check
      _
    $region23: #{tpu_custom_call.1} parent=1 // pred_check_branch
      %192 = sbr.rel (0) target = $region25
    $region24: #{tpu_custom_call.1} parent=1 // pred_region
      %s194 = ssub.s32 256, 256
      %195 = vsyncadd [#allocation5], %s194
      %s196 = sshll.u32 [#allocation8], 4
      %s197 = int_to_ptr.vmem [resolvable:$true] %s196
      %202 = dma.vmem_to_hbm [thread:$0]  %s197, 256, %s3, [#allocation5], 128, 128, 8
    $region25: #{tpu_custom_call.1} parent=1 // pred_fallthru
      _
    // Predicated region
    $region26: #{tpu_custom_call.1} parent=1 // pred_check
      _
    $region27: #{tpu_custom_call.1} parent=1 // pred_check_branch
      %204 = sbr.rel (0) target = $region29
    $region28: #{tpu_custom_call.1} parent=1 // pred_region
      %205 = dma.done [#allocation5], 256
    $region29: #{tpu_custom_call.1} parent=1 // pred_fallthru
      _
    %206 = vsyncpa [#allocation4], 1
    %207 = vsyncpa [#allocation7], 1
    %208 = vsyncpa [#allocation5], 1

</llo_original>
